<compile_context>
chip_gen: v5e
topology: v5e:2x2
jax: 0.10.0
libtpu: 0.0.40
codegen_flags: <defaults>
</compile_context>

<pallas_src>
import functools
import numpy as np
import jax
import jax.numpy as jnp
from jax import lax
from jax.experimental import pallas as pl
from jax.experimental.pallas import tpu as pltpu

_CP = pltpu.CompilerParams(dimension_semantics=("arbitrary",))


def _full_spec(shape):
    # One block covering the whole array (grid=(1,)).
    return pl.BlockSpec(shape, lambda *_, n=len(shape): (0,) * n)


def _round_up(x, m):
    return (x + m - 1) // m * m


# ----------------------------- BiLSTM kernel ------------------------------- #

def _bilstm_dir_kernel(len_ref, x_ref, h0_ref, c0_ref, wih_ref, b_ref, whh_ref,
                       out_ref, xp_st, h_st, c_st, *, hidden, seq_len, n_chunks):
    """One full direction of one BiLSTM layer (entire time recurrence in-kernel).

    grid=(2,): d=0 forward, d=1 backward (time direction realized via index math).
    x_ref      : (n_chunks, T*Bp, n_in)  flattened time-major input chunks
    wih_ref    : (n_chunks, n_in, 4H)    per-direction input weights (chunked)
    whh_ref    : (H, 4H), b_ref: (1, 4H), h0/c0: (Bp, H), len_ref: (Bp, 1) int32
    out_ref    : (T, Bp, H)              per-direction output slice
    """
    H = hidden
    T = seq_len
    Bp = h0_ref.shape[0]
    d = pl.program_id(0)

    # --- fused input projection: one lane-dense (T*Bp, n_in) @ (n_in, 4H) matmul ---
    acc = jnp.dot(x_ref[0], wih_ref[0], preferred_element_type=jnp.float32)
    for c in range(1, n_chunks):
        acc = acc + jnp.dot(x_ref[c], wih_ref[c],
                            preferred_element_type=jnp.float32)
    xp_st[...] = acc + b_ref[...]                         # (T*Bp, 4H)

    h_st[...] = h0_ref[...]
    c_st[...] = c0_ref[...]
    lens = len_ref[...]                                   # (Bp, 1) int32
    whh = whh_ref[...]                                    # resident (H, 4H)

    def step(s, carry):
        t = (T - 1) * d + (1 - 2 * d) * s                 # d=0: t=s ; d=1: t=T-1-s
        mask = (t < lens).astype(jnp.float32)             # (Bp, 1) packed-seq mask
        row = pl.multiple_of(t * Bp, 8)                   # Bp % 8 == 0 -> aligned
        gates = xp_st[pl.ds(row, Bp), :] + jnp.dot(
            h_st[...], whh, preferred_element_type=jnp.float32)      # (Bp, 4H)
        i = jax.nn.sigmoid(gates[:, 0 * H:1 * H])         # PyTorch order: i, f, g, o
        f = jax.nn.sigmoid(gates[:, 1 * H:2 * H])
        g = jnp.tanh(gates[:, 2 * H:3 * H])
        o = jax.nn.sigmoid(gates[:, 3 * H:4 * H])
        c_new = f * c_st[...] + i * g
        h_new = o * jnp.tanh(c_new)
        h_st[...] = mask * h_new + (1.0 - mask) * h_st[...]   # freeze past len
        c_st[...] = mask * c_new + (1.0 - mask) * c_st[...]
        out_ref[t] = mask * h_new                          # pad_packed zero padding
        return carry

    lax.fori_loop(0, T, step, 0)


def _bilstm_layer(x_flat, lens_col, h0, c0, wih_T, bias, whh_T, seq_len):
    # x_flat: (n_chunks, T*Bp, n_in)  ->  out: (2, T, Bp, H)
    n_chunks, TB, n_in = x_flat.shape
    H = whh_T.shape[1]
    T = seq_len
    Bp = TB // T
    kernel = functools.partial(_bilstm_dir_kernel, hidden=H, seq_len=T,
                               n_chunks=n_chunks)
    return pl.pallas_call(
        kernel,
        grid=(2,),
        in_specs=[
            pl.BlockSpec((Bp, 1), lambda d: (0, 0)),                    # lens
            pl.BlockSpec((n_chunks, TB, n_in), lambda d: (0, 0, 0)),    # x (shared)
            pl.BlockSpec((None, Bp, H), lambda d: (d, 0, 0)),           # h0[d]
            pl.BlockSpec((None, Bp, H), lambda d: (d, 0, 0)),           # c0[d]
            pl.BlockSpec((None, n_chunks, n_in, 4 * H),
                         lambda d: (d, 0, 0, 0)),                       # W_ih[d]
            pl.BlockSpec((None, 1, 4 * H), lambda d: (d, 0, 0)),        # bias[d]
            pl.BlockSpec((None, H, 4 * H), lambda d: (d, 0, 0)),        # W_hh[d]
        ],
        out_specs=pl.BlockSpec((None, T, Bp, H), lambda d: (d, 0, 0, 0)),
        out_shape=jax.ShapeDtypeStruct((2, T, Bp, H), jnp.float32),
        scratch_shapes=[pltpu.VMEM((TB, 4 * H), jnp.float32),   # xproj slab
                        pltpu.VMEM((Bp, H), jnp.float32),       # h state
                        pltpu.VMEM((Bp, H), jnp.float32)],      # c state
        compiler_params=pltpu.CompilerParams(
            dimension_semantics=("parallel",)),
    )(lens_col, x_flat, h0, c0, wih_T, bias, whh_T)


def bilstm(x_tm, lens, params, h0=None, c0=None):
    # x_tm: (T, Bp, N_in) time-major, Bp % 8 == 0. Returns last layer (2, T, Bp, H).
    T, Bp, n_in = x_tm.shape
    H = params['hidden']
    n_layers = len(params['layers'])
    if h0 is None:
        h0 = jnp.zeros((2 * n_layers, Bp, H), jnp.float32)
        c0 = jnp.zeros((2 * n_layers, Bp, H), jnp.float32)
    lens_col = lens.reshape(Bp, 1).astype(jnp.int32)
    x_flat = x_tm.reshape(1, T * Bp, n_in)
    out = None
    for l, layer in enumerate(params['layers']):
        out = _bilstm_layer(x_flat, lens_col, h0[2 * l:2 * l + 2],
                            c0[2 * l:2 * l + 2], layer['wih_T'],
                            layer['bias'], layer['whh_T'], T)   # (2, T, Bp, H)
        x_flat = out.reshape(2, T * Bp, H)   # contiguous relabel, no relayout
    return out


# --------------------- fused epilogue kernels ------------------------------ #

def _col_att_c2h_kernel(e_ref, w_ref, b_ref, len_ref, c2h_w_ref, c2h_b_ref, o_ref):
    # Linear(N_h->1) score + length-masked softmax + weighted sum + col2hid1/2.
    enc = e_ref[...]                                           # (B, C, N_h)
    att = jnp.sum(enc * w_ref[...], axis=-1) + b_ref[...]      # (B, C)
    B, C = att.shape
    cidx = lax.broadcasted_iota(jnp.int32, (B, C), 1)
    masked = jnp.where(cidx < len_ref[...], att, -1000000.0)
    mx = jnp.max(masked, axis=-1, keepdims=True)
    ex = jnp.exp(masked - mx)
    p = ex * pl.reciprocal(jnp.sum(ex, axis=-1, keepdims=True), approx=True)
    K = jnp.sum(enc * p[:, :, None], axis=1)                   # (B, N_h)
    o_ref[...] = (jnp.dot(K, c2h_w_ref[...],
                          preferred_element_type=jnp.float32) + c2h_b_ref[...])


def col_att_c2h(enc, w, b, lens, c2h_w, c2h_b):
    Bq, C, D = enc.shape
    N4 = c2h_w.shape[1]
    return pl.pallas_call(
        _col_att_c2h_kernel,
        grid=(1,),
        in_specs=[_full_spec((Bq, C, D)), _full_spec((1, D)), _full_spec((1, 1)),
                  _full_spec((Bq, 1)), _full_spec((D, N4)), _full_spec((1, N4))],
        out_specs=_full_spec((Bq, N4)),
        out_shape=jax.ShapeDtypeStruct((Bq, N4), jnp.float32),
        compiler_params=_CP,
    )(enc, w, b, lens, c2h_w, c2h_b)


def _q_att_head_kernel(e_ref, w_ref, b_ref, len_ref, w1_ref, b1_ref,
                       w2_ref, b2_ref, o_ref):
    # Direction-split question attention + masked softmax pool + Linear-Tanh-Linear.
    e_f = e_ref[0]                                             # (T, B, H) fwd
    e_b = e_ref[1]                                             # (T, B, H) bwd
    att = (jnp.sum(e_f * w_ref[0], axis=-1) +
           jnp.sum(e_b * w_ref[1], axis=-1) + b_ref[...])      # (T, B)
    T, B = att.shape
    tidx = lax.broadcasted_iota(jnp.int32, (T, B), 0)
    masked = jnp.where(tidx < len_ref[...], att, -1000000.0)
    mx = jnp.max(masked, axis=0, keepdims=True)
    ex = jnp.exp(masked - mx)
    p = ex * pl.reciprocal(jnp.sum(ex, axis=0, keepdims=True), approx=True)
    pooled_f = jnp.sum(e_f * p[:, :, None], axis=0)            # (B, H)
    pooled_b = jnp.sum(e_b * p[:, :, None], axis=0)            # (B, H)
    h1 = jnp.tanh(jnp.dot(pooled_f, w1_ref[0], preferred_element_type=jnp.float32)
                  + jnp.dot(pooled_b, w1_ref[1], preferred_element_type=jnp.float32)
                  + b1_ref[...])
    o_ref[...] = (jnp.dot(h1, w2_ref[...],
                          preferred_element_type=jnp.float32) + b2_ref[...])


def q_att_head(enc, att_w2, att_b, lens_row, out1_w2, out1_b, out2_w, out2_b):
    _, T, Bq, H = enc.shape
    N_h = out1_w2.shape[2]
    n_out = out2_w.shape[1]
    return pl.pallas_call(
        _q_att_head_kernel,
        grid=(1,),
        in_specs=[_full_spec((2, T, Bq, H)), _full_spec((2, 1, H)),
                  _full_spec((1, 1)), _full_spec((1, Bq)),
                  _full_spec((2, H, N_h)), _full_spec((1, N_h)),
                  _full_spec((N_h, n_out)), _full_spec((1, n_out))],
        out_specs=_full_spec((Bq, n_out)),
        out_shape=jax.ShapeDtypeStruct((Bq, n_out), jnp.float32),
        compiler_params=_CP,
    )(enc, att_w2, att_b, lens_row, out1_w2, out1_b, out2_w, out2_b)


# ----------------------------- parameters ---------------------------------- #

def init_params(key, N_word, N_h, N_depth):
    H = N_h // 2
    keys = iter(jax.random.split(key, 64))

    def w(shape, scale=0.1):
        return (scale * jax.random.normal(next(keys), shape)).astype(jnp.float32)

    layers = []
    for l in range(N_depth):
        n_in = N_word if l == 0 else N_h
        n_chunks = 1 if l == 0 else 2         # layer>0 input arrives as fwd/bwd halves
        n_in_c = n_in // n_chunks
        wih_T, whh_T, bias = [], [], []
        for _d in range(2):                   # d==0 forward, d==1 backward
            wih = w((4 * H, n_in))
            whh = w((4 * H, H))
            bih = w((4 * H,))
            bhh = w((4 * H,))
            wih_T.append(wih.T.reshape(n_chunks, n_in_c, 4 * H))
            whh_T.append(whh.T)
            bias.append((bih + bhh).reshape(1, 4 * H))
        layers.append(dict(
            wih_T=jnp.stack(wih_T, axis=0),    # (2, n_chunks, n_in_c, 4H)
            bias=jnp.stack(bias, axis=0),      # (2, 1, 4H)
            whh_T=jnp.stack(whh_T, axis=0),    # (2, H, 4H)
        ))

    params = dict(hidden=H, layers=layers)
    params['col_att_w'] = w((1, N_h))                      # Linear(N_h, 1)
    params['col_att_b'] = w((1, 1))
    att_w = w((1, N_h))
    params['att_w2'] = att_w.reshape(2, 1, H)              # split fwd/bwd halves
    params['att_b'] = w((1, 1))
    # col2hid1 / col2hid2 fused: (N_h, 4*N_h) weight, (1, 4*N_h) bias.
    c2h1_w, c2h2_w = w((2 * N_h, N_h)), w((2 * N_h, N_h))
    c2h1_b, c2h2_b = w((2 * N_h,)), w((2 * N_h,))
    params['c2h_w_T'] = jnp.concatenate([c2h1_w.T, c2h2_w.T], axis=1)
    params['c2h_b'] = jnp.concatenate([c2h1_b, c2h2_b]).reshape(1, 4 * N_h)
    out1_w = w((N_h, N_h))
    params['out1_w2'] = out1_w.T.reshape(2, H, N_h)        # split fwd/bwd input halves
    params['out1_b'] = w((1, N_h))
    params['out2_w_T'] = w((4, N_h)).T
    params['out2_b'] = w((1, 4))
    return params


# ------------------------------ forward ------------------------------------ #

def sel_num_predictor_forward(params, x_emb_var, x_len, col_inp_var,
                              col_name_len, col_len, col_num, N_h):
    B = len(x_len)
    H = N_h // 2

    # ---- col_name_encode: BiLSTM over each column name, take output at len-1 ----
    total, Tn, _ = col_inp_var.shape
    Bn = _round_up(total, 8)
    name_len_np = np.asarray(col_name_len, np.int32)
    name_lens = np.zeros((Bn,), np.int32)
    name_lens[:total] = name_len_np
    col_tm = jnp.transpose(col_inp_var, (1, 0, 2))                   # (Tn, total, N_word)
    if Bn > total:
        col_tm = jnp.pad(col_tm, ((0, 0), (0, Bn - total), (0, 0)))
    name_hidden = bilstm(col_tm, jnp.asarray(name_lens), params)     # (2, Tn, Bn, H)
    last = name_hidden[:, name_len_np - 1, np.arange(total)]         # (2, total, H)
    name_out = jnp.transpose(last, (1, 0, 2)).reshape(total, N_h)    # [fwd || bwd]

    # ---- per-example column scatter replaced by ONE gather (indices host-side) ----
    max_col = max(col_len)
    Bq = _round_up(B, 8)
    offsets = np.concatenate([[0], np.cumsum(col_len)[:-1]]).astype(np.int32)
    gidx = np.zeros((Bq, max_col), np.int32)
    valid = np.zeros((Bq, max_col, 1), np.float32)
    for bb, cur in enumerate(col_len):
        gidx[bb, :cur] = offsets[bb] + np.arange(cur, dtype=np.int32)
        valid[bb, :cur] = 1.0
    e_num_col = name_out[jnp.asarray(gidx)] * jnp.asarray(valid)     # (Bq, max_col, N_h)
    col_num_pad = np.zeros((Bq, 1), np.int32)
    col_num_pad[:B, 0] = np.asarray(col_num, np.int32)

    # ---- fused: column attention + masked softmax pool + col2hid1/col2hid2 ----
    hcat = col_att_c2h(e_num_col, params['col_att_w'], params['col_att_b'],
                       jnp.asarray(col_num_pad), params['c2h_w_T'],
                       params['c2h_b'])                              # (Bq, 4*N_h)
    h0 = jnp.transpose(hcat[:, :2 * N_h].reshape(Bq, 4, H), (1, 0, 2))   # (4, Bq, H)
    c0 = jnp.transpose(hcat[:, 2 * N_h:].reshape(Bq, 4, H), (1, 0, 2))

    # ---- question BiLSTM with column-conditioned initial state ----
    x_lens = np.zeros((Bq,), np.int32)
    x_lens[:B] = np.asarray(x_len, np.int32)
    x_tm = jnp.transpose(x_emb_var, (1, 0, 2))                       # (T, B, N_word)
    if Bq > B:
        x_tm = jnp.pad(x_tm, ((0, 0), (0, Bq - B), (0, 0)))
    h_num_enc = bilstm(x_tm, jnp.asarray(x_lens), params, h0=h0, c0=c0)  # (2, T, Bq, H)

    # ---- fused: question attention + masked softmax pool + Linear-Tanh-Linear ----
    score = q_att_head(h_num_enc, params['att_w2'], params['att_b'],
                       jnp.asarray(x_lens.reshape(1, Bq)),
                       params['out1_w2'], params['out1_b'],
                       params['out2_w_T'], params['out2_b'])         # (Bq, 4)
    return score[:B]


# --------------------------------- main ------------------------------------ #

if __name__ == "__main__":
    N_word, N_h, N_depth = 32, 32, 2   # N_depth must be 2 (module hardcodes 4 = 2 layers * 2 dirs)
    B = 2
    x_len = [8, 6]
    col_len = [3, 4]                      # columns per example
    col_num = list(col_len)
    col_name_len = [2, 3, 1, 4, 2, 3, 2]  # tokens per column name (sum(col_len) names)
    total_names = sum(col_len)
    max_name_len = max(col_name_len)

    key = jax.random.PRNGKey(0)
    k1, k2, k3 = jax.random.split(key, 3)
    params = init_params(k1, N_word, N_h, N_depth)
    x_emb_var = jax.random.normal(k2, (B, max(x_len), N_word), jnp.float32)
    col_inp_var = jax.random.normal(k3, (total_names, max_name_len, N_word), jnp.float32)

    score = sel_num_predictor_forward(params, x_emb_var, x_len, col_inp_var,
                                      col_name_len, col_len, col_num, N_h)
    score = jax.block_until_ready(score)
    assert score.shape == (B, 4) and score.dtype == jnp.float32
    assert bool(jnp.all(jnp.isfinite(score)))
    print("KERNEL_OK")
</pallas_src>

<mosaic_0001>
module attributes {stable_mosaic.version = 11 : i64} {
  func.func @_bilstm_dir_kernel(%arg0: i32, %arg1: memref<8x1xi32, #tpu.memory_space<vmem>>, %arg2: memref<1x32x32xf32, #tpu.memory_space<vmem>>, %arg3: memref<1x8x16xf32, #tpu.memory_space<vmem>>, %arg4: memref<1x8x16xf32, #tpu.memory_space<vmem>>, %arg5: memref<1x1x32x64xf32, #tpu.memory_space<vmem>>, %arg6: memref<1x1x64xf32, #tpu.memory_space<vmem>>, %arg7: memref<1x16x64xf32, #tpu.memory_space<vmem>>, %arg8: memref<1x4x8x16xf32, #tpu.memory_space<vmem>>, %arg9: memref<32x64xf32, #tpu.memory_space<vmem>>, %arg10: memref<8x16xf32, #tpu.memory_space<vmem>>, %arg11: memref<8x16xf32, #tpu.memory_space<vmem>>) attributes {dimension_semantics = [#tpu.dimension_semantics<parallel>], iteration_bounds = array<i64: 2>, scalar_prefetch = 0 : i64, scratch_operands = 3 : i64, tpu.core_type = #tpu.core_type<tc>, window_params = [{pipeline_mode = #tpu.pipeline_mode<synchronous>, transform_indices = @transform_0, window_bounds = array<i64: 8, 1>}, {pipeline_mode = #tpu.pipeline_mode<synchronous>, transform_indices = @transform_1, window_bounds = array<i64: 1, 32, 32>}, {transform_indices = @transform_2, window_bounds = array<i64: 1, 8, 16>}, {transform_indices = @transform_3, window_bounds = array<i64: 1, 8, 16>}, {transform_indices = @transform_4, window_bounds = array<i64: 1, 1, 32, 64>}, {transform_indices = @transform_5, window_bounds = array<i64: 1, 1, 64>}, {transform_indices = @transform_6, window_bounds = array<i64: 1, 16, 64>}, {transform_indices = @transform_7, window_bounds = array<i64: 1, 4, 8, 16>}]} {
    %c0 = arith.constant 0 : index
    %c0_0 = arith.constant 0 : index
    %c0_1 = arith.constant 0 : index
    %0 = vector.load %arg2[%c0, %c0_0, %c0_1] : memref<1x32x32xf32, #tpu.memory_space<vmem>>, vector<1x32x32xf32>
    %1 = vector.shape_cast %0 : vector<1x32x32xf32> to vector<32x32xf32>
    %c0_2 = arith.constant 0 : index
    %c0_3 = arith.constant 0 : index
    %c0_4 = arith.constant 0 : index
    %c0_5 = arith.constant 0 : index
    %2 = vector.load %arg5[%c0_2, %c0_3, %c0_4, %c0_5] : memref<1x1x32x64xf32, #tpu.memory_space<vmem>>, vector<1x1x32x64xf32>
    %3 = vector.shape_cast %2 : vector<1x1x32x64xf32> to vector<32x64xf32>
    %cst = arith.constant dense<0.000000e+00> : vector<32x64xf32>
    %4 = tpu.matmul %1, %3, %cst {dimension_numbers = #tpu.dot_dimension_numbers<[1], [0], [0], [1], [0, 0, 1, 1], [], []>} : vector<32x32xf32>, vector<32x64xf32>, vector<32x64xf32> -> vector<32x64xf32>
    %c0_6 = arith.constant 0 : index
    %c0_7 = arith.constant 0 : index
    %c0_8 = arith.constant 0 : index
    %5 = vector.load %arg6[%c0_6, %c0_7, %c0_8] : memref<1x1x64xf32, #tpu.memory_space<vmem>>, vector<1x1x64xf32>
    %6 = vector.shape_cast %5 : vector<1x1x64xf32> to vector<1x64xf32>
    %7 = vector.broadcast %6 : vector<1x64xf32> to vector<32x64xf32>
    %8 = arith.addf %4, %7 : vector<32x64xf32>
    %c0_9 = arith.constant 0 : index
    %c0_10 = arith.constant 0 : index
    %9 = vector.load %arg9[%c0_9, %c0_10] : memref<32x64xf32, #tpu.memory_space<vmem>>, vector<32x64xf32>
    tpu.vector_store %arg9[%c0_9, %c0_10], %8 {strides = array<i32>} : memref<32x64xf32, #tpu.memory_space<vmem>>, vector<32x64xf32>,
    %c0_11 = arith.constant 0 : index
    %c0_12 = arith.constant 0 : index
    %c0_13 = arith.constant 0 : index
    %10 = vector.load %arg3[%c0_11, %c0_12, %c0_13] : memref<1x8x16xf32, #tpu.memory_space<vmem>>, vector<1x8x16xf32>
    %11 = vector.shape_cast %10 : vector<1x8x16xf32> to vector<8x16xf32>
    %c0_14 = arith.constant 0 : index
    %c0_15 = arith.constant 0 : index
    %12 = vector.load %arg10[%c0_14, %c0_15] : memref<8x16xf32, #tpu.memory_space<vmem>>, vector<8x16xf32>
    tpu.vector_store %arg10[%c0_14, %c0_15], %11 {strides = array<i32>} : memref<8x16xf32, #tpu.memory_space<vmem>>, vector<8x16xf32>,
    %c0_16 = arith.constant 0 : index
    %c0_17 = arith.constant 0 : index
    %c0_18 = arith.constant 0 : index
    %13 = vector.load %arg4[%c0_16, %c0_17, %c0_18] : memref<1x8x16xf32, #tpu.memory_space<vmem>>, vector<1x8x16xf32>
    %14 = vector.shape_cast %13 : vector<1x8x16xf32> to vector<8x16xf32>
    %c0_19 = arith.constant 0 : index
    %c0_20 = arith.constant 0 : index
    %15 = vector.load %arg11[%c0_19, %c0_20] : memref<8x16xf32, #tpu.memory_space<vmem>>, vector<8x16xf32>
    tpu.vector_store %arg11[%c0_19, %c0_20], %14 {strides = array<i32>} : memref<8x16xf32, #tpu.memory_space<vmem>>, vector<8x16xf32>,
    %c0_21 = arith.constant 0 : index
    %c0_22 = arith.constant 0 : index
    %16 = vector.load %arg1[%c0_21, %c0_22] : memref<8x1xi32, #tpu.memory_space<vmem>>, vector<8x1xi32>
    %c0_23 = arith.constant 0 : index
    %c0_24 = arith.constant 0 : index
    %c0_25 = arith.constant 0 : index
    %17 = vector.load %arg7[%c0_23, %c0_24, %c0_25] : memref<1x16x64xf32, #tpu.memory_space<vmem>>, vector<1x16x64xf32>
    %18 = vector.shape_cast %17 : vector<1x16x64xf32> to vector<16x64xf32>
    %c0_i32 = arith.constant 0 : i32
    %c4_i32 = arith.constant 4 : i32
    %19 = arith.addi %c0_i32, %c4_i32 : i32
    %c1_i32 = arith.constant 1 : i32
    scf.for %arg12 = %c0_i32 to %19 step %c1_i32  : i32 {
      %c3_i32 = arith.constant 3 : i32
      %20 = arith.muli %c3_i32, %arg0 : i32
      %c2_i32 = arith.constant 2 : i32
      %21 = arith.muli %c2_i32, %arg0 : i32
      %c1_i32_27 = arith.constant 1 : i32
      %22 = arith.subi %c1_i32_27, %21 : i32
      %23 = arith.muli %22, %arg12 : i32
      %24 = arith.addi %20, %23 : i32
      %25 = vector.broadcast %24 : i32 to vector<8x1xi32>
      %26 = arith.cmpi slt, %25, %16 : vector<8x1xi32>
      %27 = arith.extui %26 : vector<8x1xi1> to vector<8x1xi32>
      %28 = arith.sitofp %27 : vector<8x1xi32> to vector<8x1xf32>
      %c8_i32 = arith.constant 8 : i32
      %29 = arith.muli %24, %c8_i32 : i32
      %30 = tpu.assume_multiple %29, 8 : i32
      %31 = arith.index_cast %30 : i32 to index
      %c0_28 = arith.constant 0 : index
      %32 = vector.load %arg9[%31, %c0_28] : memref<32x64xf32, #tpu.memory_space<vmem>>, vector<8x64xf32>
      %c0_29 = arith.constant 0 : index
      %c0_30 = arith.constant 0 : index
      %33 = vector.load %arg10[%c0_29, %c0_30] : memref<8x16xf32, #tpu.memory_space<vmem>>, vector<8x16xf32>
      %cst_31 = arith.constant dense<0.000000e+00> : vector<8x64xf32>
      %34 = tpu.matmul %33, %18, %cst_31 {dimension_numbers = #tpu.dot_dimension_numbers<[1], [0], [0], [1], [0, 0, 1, 1], [], []>} : vector<8x16xf32>, vector<16x64xf32>, vector<8x64xf32> -> vector<8x64xf32>
      %35 = arith.addf %32, %34 : vector<8x64xf32>
      %36 = vector.extract_strided_slice %35 {offsets = [0, 0], sizes = [8, 16], strides = [1, 1]} : vector<8x64xf32> to vector<8x16xf32>
      %37 = arith.negf %36 : vector<8x16xf32>
      %38 = math.exp %37 : vector<8x16xf32>
      %cst_32 = arith.constant 1.000000e+00 : f32
      %39 = vector.broadcast %cst_32 : f32 to vector<8x16xf32>
      %40 = arith.addf %39, %38 : vector<8x16xf32>
      %41 = arith.divf %39, %40 : vector<8x16xf32>
      %42 = vector.extract_strided_slice %35 {offsets = [0, 16], sizes = [8, 16], strides = [1, 1]} : vector<8x64xf32> to vector<8x16xf32>
      %43 = arith.negf %42 : vector<8x16xf32>
      %44 = math.exp %43 : vector<8x16xf32>
      %cst_33 = arith.constant 1.000000e+00 : f32
      %45 = vector.broadcast %cst_33 : f32 to vector<8x16xf32>
      %46 = arith.addf %45, %44 : vector<8x16xf32>
      %47 = arith.divf %45, %46 : vector<8x16xf32>
      %48 = vector.extract_strided_slice %35 {offsets = [0, 32], sizes = [8, 16], strides = [1, 1]} : vector<8x64xf32> to vector<8x16xf32>
      %49 = math.tanh %48 : vector<8x16xf32>
      %50 = vector.extract_strided_slice %35 {offsets = [0, 48], sizes = [8, 16], strides = [1, 1]} : vector<8x64xf32> to vector<8x16xf32>
      %51 = arith.negf %50 : vector<8x16xf32>
      %52 = math.exp %51 : vector<8x16xf32>
      %cst_34 = arith.constant 1.000000e+00 : f32
      %53 = vector.broadcast %cst_34 : f32 to vector<8x16xf32>
      %54 = arith.addf %53, %52 : vector<8x16xf32>
      %55 = arith.divf %53, %54 : vector<8x16xf32>
      %c0_35 = arith.constant 0 : index
      %c0_36 = arith.constant 0 : index
      %56 = vector.load %arg11[%c0_35, %c0_36] : memref<8x16xf32, #tpu.memory_space<vmem>>, vector<8x16xf32>
      %57 = arith.mulf %47, %56 : vector<8x16xf32>
      %58 = arith.mulf %41, %49 : vector<8x16xf32>
      %59 = arith.addf %57, %58 : vector<8x16xf32>
      %60 = math.tanh %59 : vector<8x16xf32>
      %61 = arith.mulf %55, %60 : vector<8x16xf32>
      %62 = vector.broadcast %28 : vector<8x1xf32> to vector<8x16xf32>
      %63 = arith.mulf %62, %61 : vector<8x16xf32>
      %cst_37 = arith.constant 1.000000e+00 : f32
      %64 = vector.broadcast %cst_37 : f32 to vector<8x1xf32>
      %65 = arith.subf %64, %28 : vector<8x1xf32>
      %c0_38 = arith.constant 0 : index
      %c0_39 = arith.constant 0 : index
      %66 = vector.load %arg10[%c0_38, %c0_39] : memref<8x16xf32, #tpu.memory_space<vmem>>, vector<8x16xf32>
      %67 = vector.broadcast %65 : vector<8x1xf32> to vector<8x16xf32>
      %68 = arith.mulf %67, %66 : vector<8x16xf32>
      %69 = arith.addf %63, %68 : vector<8x16xf32>
      %c0_40 = arith.constant 0 : index
      %c0_41 = arith.constant 0 : index
      %70 = vector.load %arg10[%c0_40, %c0_41] : memref<8x16xf32, #tpu.memory_space<vmem>>, vector<8x16xf32>
      tpu.vector_store %arg10[%c0_40, %c0_41], %69 {strides = array<i32>} : memref<8x16xf32, #tpu.memory_space<vmem>>, vector<8x16xf32>,
      %71 = vector.broadcast %28 : vector<8x1xf32> to vector<8x16xf32>
      %72 = arith.mulf %71, %59 : vector<8x16xf32>
      %cst_42 = arith.constant 1.000000e+00 : f32
      %73 = vector.broadcast %cst_42 : f32 to vector<8x1xf32>
      %74 = arith.subf %73, %28 : vector<8x1xf32>
      %c0_43 = arith.constant 0 : index
      %c0_44 = arith.constant 0 : index
      %75 = vector.load %arg11[%c0_43, %c0_44] : memref<8x16xf32, #tpu.memory_space<vmem>>, vector<8x16xf32>
      %76 = vector.broadcast %74 : vector<8x1xf32> to vector<8x16xf32>
      %77 = arith.mulf %76, %75 : vector<8x16xf32>
      %78 = arith.addf %72, %77 : vector<8x16xf32>
      %c0_45 = arith.constant 0 : index
      %c0_46 = arith.constant 0 : index
      %79 = vector.load %arg11[%c0_45, %c0_46] : memref<8x16xf32, #tpu.memory_space<vmem>>, vector<8x16xf32>
      tpu.vector_store %arg11[%c0_45, %c0_46], %78 {strides = array<i32>} : memref<8x16xf32, #tpu.memory_space<vmem>>, vector<8x16xf32>,
      %80 = vector.broadcast %28 : vector<8x1xf32> to vector<8x16xf32>
      %81 = arith.mulf %80, %61 : vector<8x16xf32>
      %c0_47 = arith.constant 0 : index
      %82 = arith.index_cast %24 : i32 to index
      %c0_48 = arith.constant 0 : index
      %c0_49 = arith.constant 0 : index
      %83 = vector.load %arg8[%c0_47, %82, %c0_48, %c0_49] : memref<1x4x8x16xf32, #tpu.memory_space<vmem>>, vector<1x1x8x16xf32>
      %84 = vector.shape_cast %83 : vector<1x1x8x16xf32> to vector<8x16xf32>
      %85 = vector.shape_cast %81 : vector<8x16xf32> to vector<1x1x8x16xf32>
      tpu.vector_store %arg8[%c0_47, %82, %c0_48, %c0_49], %85 {strides = array<i32>} : memref<1x4x8x16xf32, #tpu.memory_space<vmem>>, vector<1x1x8x16xf32>,
    }
    %c4_i32_26 = arith.constant 4 : i32
    return
  }
  func.func @transform_0(%arg0: i32) -> (i32, i32) {
    %c0_i32 = arith.constant 0 : i32
    %c0_i32_0 = arith.constant 0 : i32
    %c0_i32_1 = arith.constant 0 : i32
    return %c0_i32, %c0_i32_0 : i32, i32
  }
  func.func @transform_1(%arg0: i32) -> (i32, i32, i32) {
    %c0_i32 = arith.constant 0 : i32
    %c0_i32_0 = arith.constant 0 : i32
    %c0_i32_1 = arith.constant 0 : i32
    %c0_i32_2 = arith.constant 0 : i32
    return %c0_i32, %c0_i32_0, %c0_i32_1 : i32, i32, i32
  }
  func.func @transform_2(%arg0: i32) -> (i32, i32, i32) {
    %c0_i32 = arith.constant 0 : i32
    %c0_i32_0 = arith.constant 0 : i32
    %c0_i32_1 = arith.constant 0 : i32
    return %arg0, %c0_i32, %c0_i32_0 : i32, i32, i32
  }
  func.func @transform_3(%arg0: i32) -> (i32, i32, i32) {
    %c0_i32 = arith.constant 0 : i32
    %c0_i32_0 = arith.constant 0 : i32
    %c0_i32_1 = arith.constant 0 : i32
    return %arg0, %c0_i32, %c0_i32_0 : i32, i32, i32
  }
  func.func @transform_4(%arg0: i32) -> (i32, i32, i32, i32) {
    %c0_i32 = arith.constant 0 : i32
    %c0_i32_0 = arith.constant 0 : i32
    %c0_i32_1 = arith.constant 0 : i32
    %c0_i32_2 = arith.constant 0 : i32
    return %arg0, %c0_i32, %c0_i32_0, %c0_i32_1 : i32, i32, i32, i32
  }
  func.func @transform_5(%arg0: i32) -> (i32, i32, i32) {
    %c0_i32 = arith.constant 0 : i32
    %c0_i32_0 = arith.constant 0 : i32
    %c0_i32_1 = arith.constant 0 : i32
    return %arg0, %c0_i32, %c0_i32_0 : i32, i32, i32
  }
  func.func @transform_6(%arg0: i32) -> (i32, i32, i32) {
    %c0_i32 = arith.constant 0 : i32
    %c0_i32_0 = arith.constant 0 : i32
    %c0_i32_1 = arith.constant 0 : i32
    return %arg0, %c0_i32, %c0_i32_0 : i32, i32, i32
  }
  func.func @transform_7(%arg0: i32) -> (i32, i32, i32, i32) {
    %c0_i32 = arith.constant 0 : i32
    %c0_i32_0 = arith.constant 0 : i32
    %c0_i32_1 = arith.constant 0 : i32
    %c0_i32_2 = arith.constant 0 : i32
    return %arg0, %c0_i32, %c0_i32_0, %c0_i32_1 : i32, i32, i32, i32
  }
}

</mosaic_0001>

<llo_original>
// kernel: tpu_custom_call.1
$region0: #{tpu_custom_call.1}
  #allocation0 [shape = 'u32[]', space=smem, size = 0x4, offset = 0x4, fixed_abs, tag = 'smem constant byte address 0x4 - core index']
  #allocation1 [shape = 'u32[72,128]{1,0:T(1,128)}', space=vmem, size = 0x9000, scoped, tag = 'internal scratch']
  #allocation2 [shape = 'f32[32,64]{1,0:T(8,128)}', space=vmem, size = 0x4000, scoped, tag = 'scratch operand']
  #allocation3 [shape = 'f32[8,16]{1,0:T(8,128)}', space=vmem, size = 0x1000, scoped, tag = 'scratch operand']
  #allocation4 [shape = 'f32[8,16]{1,0:T(8,128)}', space=vmem, size = 0x1000, scoped, tag = 'scratch operand']
  %s0 = inlined_call_operand.vmem [shape: s32[8,1], index: 0, kind: input, shape index: {}]
  %s1 = inlined_call_operand.hbm [shape: f32[1,32,32], index: 1, kind: input, shape index: {}]
  %s2 = inlined_call_operand.hbm [shape: f32[2,8,16], index: 2, kind: input, shape index: {}]
  %s3 = inlined_call_operand.hbm [shape: f32[2,8,16], index: 3, kind: input, shape index: {}]
  %s4 = inlined_call_operand.hbm [shape: f32[2,1,32,64], index: 4, kind: input, shape index: {}]
  %s5 = inlined_call_operand.vmem [shape: f32[2,1,64], index: 5, kind: input, shape index: {}]
  %s6 = inlined_call_operand.hbm [shape: f32[2,16,64], index: 6, kind: input, shape index: {}]
  %s7 = inlined_call_operand.hbm [shape: f32[2,4,8,16], index: 7, kind: output, shape index: {}]
  %s8 = sld [smem:[#allocation0]]
  $region88: #{tpu_custom_call.1} parent=0
    _
  %s10 = ssub.s32 1, %s8
  %s11 = scalar_select 0, %s10, %s8
  $region1: #{tpu_custom_call.1} parent=0
    #allocation5 [shape = 'u8[16384]{0}', space=vmem, size = 0x4000, scoped, tag = 'input window, operand 1, single buffered']
    #allocation6 [shape = 's32[2]{0}', space=sflag, size = 0x8, scoped, tag = 'scoped memory for tpu_custom_call.1']
    #allocation7 [shape = 's32[2]{0}', space=sflag, size = 0x8, scoped, tag = 'scoped memory for tpu_custom_call.1']
    #allocation8 [shape = 'u8[8192]{0}', space=vmem, size = 0x2000, scoped, tag = 'input window, operand 2']
    #allocation9 [shape = 's32[2]{0}', space=sflag, size = 0x8, scoped, tag = 'scoped memory for tpu_custom_call.1']
    #allocation10 [shape = 'u8[8192]{0}', space=vmem, size = 0x2000, scoped, tag = 'input window, operand 3']
    #allocation11 [shape = 'u8[32768]{0}', space=vmem, size = 0x8000, scoped, tag = 'input window, operand 4']
    #allocation12 [shape = 's32[2]{0}', space=sflag, size = 0x8, scoped, tag = 'scoped memory for tpu_custom_call.1']
    #allocation13 [shape = 'u8[16384]{0}', space=vmem, size = 0x4000, scoped, tag = 'input window, operand 6']
    #allocation14 [shape = 'u8[32768]{0}', space=vmem, size = 0x8000, scoped, tag = 'output window, operand 0']
    %12 = vsyncpa [#allocation6], 0
    %13 = vsyncpa [#allocation9], 0
    %s14 = scalar_lea.sflag [#allocation9], 1
    %15 = vsyncpa %s14, 0
    %16 = vsyncpa [#allocation12], 0
    %s17 = scalar_lea.sflag [#allocation12], 1
    %18 = vsyncpa %s17, 0
    %19 = vsyncpa [#allocation7], 0
    %s20 = scalar_lea.sflag [#allocation7], 1
    %21 = vsyncpa %s20, 0
    loop: start=0, step=1, limit=4
    $region2: #{tpu_custom_call.1} parent=1 // loop_pre_header
      _
    $region3: #{tpu_custom_call.1} parent=1 // loop_header
      %s23 = sphi 0, %s27
      %p24 = scmp.ge.s32.totalorder %s23, 4
      %s31 = sphi 0, %s31
      %s33 = sphi 0, %s31
      %s34 = sphi 0, %s33
      %s48 = sphi 0, %s34
      %s52 = sphi 0, %s52
      %s54 = sphi 0, %s52
      %s55 = sphi 0, %s54
      %s69 = sphi 0, %s55
      %s75 = sphi 0, %s77
      %s78 = sphi 0, %s75
      %s79 = sphi 0, %s78
      %s95 = sphi 0, %s79
      %s101 = sphi 0, %s103
      %s104 = sphi 0, %s101
      %s105 = sphi 0, %s104
      %s121 = sphi 0, %s105
      %s127 = sphi 0, %s129
      %s130 = sphi 0, %s127
      %s131 = sphi 0, %s130
      %s147 = sphi 0, %s131
      %s153 = sphi 0, %s155
      %s156 = sphi 0, %s153
      %s157 = sphi 0, %s156
      %s173 = sphi 0, %s157
      %s179 = sphi 0, %s181
      %s182 = sphi 0, %s179
      %s183 = sphi 0, %s182
      %s199 = sphi 0, %s183
      %s205 = sphi 0, %s207
      %s208 = sphi 0, %s205
      %s209 = sphi 0, %s208
      %s225 = sphi 0, %s209
    $region4: #{tpu_custom_call.1} parent=1 // loop_header_branch
      %26 = sbr.rel (%p24) target = $region8
    $region5: #{tpu_custom_call.1} parent=1 // loop_body
      %s28 = ssub.s32 %s23, 1
      %s29 = ssub.s32 %s23, 2
      %s30 = sadd.s32 %s23, 1
      %s32 = sadd.s32 %s31, 1
      %p35 = scmp.eq.s32.totalorder %s23, 1
      %p36 = scmp.ne.s32.totalorder %s31, %s33
      %p37 = scmp.eq.s32.totalorder %s23, 0
      %p38 = por %p36, %p37
      %p39 = scmp.ne.s32.totalorder %s31, %s33
      %p40 = scmp.eq.s32.totalorder %s28, 1
      %p41 = por %p39, %p40
      %p42 = scmp.ne.s32.totalorder %s33, %s34
      %p43 = scmp.eq.s32.totalorder %s28, 0
      %p44 = por %p42, %p43
      %p45 = scmp.ne.s32.totalorder %s33, %s34
      %p46 = scmp.eq.s32.totalorder %s29, 1
      %p47 = por %p45, %p46
      %p49 = scmp.ne.s32.totalorder %s34, %s48
      %p50 = scmp.eq.s32.totalorder %s29, 0
      %p51 = por %p49, %p50
      %s53 = sadd.s32 %s52, 1
      %p56 = scmp.eq.s32.totalorder %s23, 1
      %p57 = scmp.ne.s32.totalorder %s52, %s54
      %p58 = scmp.eq.s32.totalorder %s23, 0
      %p59 = por %p57, %p58
      %p60 = scmp.ne.s32.totalorder %s52, %s54
      %p61 = scmp.eq.s32.totalorder %s28, 1
      %p62 = por %p60, %p61
      %p63 = scmp.ne.s32.totalorder %s54, %s55
      %p64 = scmp.eq.s32.totalorder %s28, 0
      %p65 = por %p63, %p64
      %p66 = scmp.ne.s32.totalorder %s54, %s55
      %p67 = scmp.eq.s32.totalorder %s29, 1
      %p68 = por %p66, %p67
      %p70 = scmp.ne.s32.totalorder %s55, %s69
      %p71 = scmp.eq.s32.totalorder %s29, 0
      %p72 = por %p70, %p71
      %s73 = ssub.s32 %s23, %s30
      %p74 = scmp.eq.s32.totalorder %s73, 0
      %s76 = sadd.s32 %s75, 1
      %s77 = scalar_select %p74, %s75, %s76
      %p80 = pneg %p74
      %p81 = scmp.eq.s32.totalorder %s23, 1
      %p82 = por %p80, %p81
      %p83 = scmp.ne.s32.totalorder %s75, %s78
      %p84 = scmp.eq.s32.totalorder %s23, 0
      %p85 = por %p83, %p84
      %p86 = scmp.ne.s32.totalorder %s75, %s78
      %p87 = scmp.eq.s32.totalorder %s28, 1
      %p88 = por %p86, %p87
      %p89 = scmp.ne.s32.totalorder %s78, %s79
      %p90 = scmp.eq.s32.totalorder %s28, 0
      %p91 = por %p89, %p90
      %p92 = scmp.ne.s32.totalorder %s78, %s79
      %p93 = scmp.eq.s32.totalorder %s29, 1
      %p94 = por %p92, %p93
      %p96 = scmp.ne.s32.totalorder %s79, %s95
      %p97 = scmp.eq.s32.totalorder %s29, 0
      %p98 = por %p96, %p97
      %s99 = ssub.s32 %s23, %s30
      %p100 = scmp.eq.s32.totalorder %s99, 0
      %s102 = sadd.s32 %s101, 1
      %s103 = scalar_select %p100, %s101, %s102
      %p106 = pneg %p100
      %p107 = scmp.eq.s32.totalorder %s23, 1
      %p108 = por %p106, %p107
      %p109 = scmp.ne.s32.totalorder %s101, %s104
      %p110 = scmp.eq.s32.totalorder %s23, 0
      %p111 = por %p109, %p110
      %p112 = scmp.ne.s32.totalorder %s101, %s104
      %p113 = scmp.eq.s32.totalorder %s28, 1
      %p114 = por %p112, %p113
      %p115 = scmp.ne.s32.totalorder %s104, %s105
      %p116 = scmp.eq.s32.totalorder %s28, 0
      %p117 = por %p115, %p116
      %p118 = scmp.ne.s32.totalorder %s104, %s105
      %p119 = scmp.eq.s32.totalorder %s29, 1
      %p120 = por %p118, %p119
      %p122 = scmp.ne.s32.totalorder %s105, %s121
      %p123 = scmp.eq.s32.totalorder %s29, 0
      %p124 = por %p122, %p123
      %s125 = ssub.s32 %s23, %s30
      %p126 = scmp.eq.s32.totalorder %s125, 0
      %s128 = sadd.s32 %s127, 1
      %s129 = scalar_select %p126, %s127, %s128
      %p132 = pneg %p126
      %p133 = scmp.eq.s32.totalorder %s23, 1
      %p134 = por %p132, %p133
      %p135 = scmp.ne.s32.totalorder %s127, %s130
      %p136 = scmp.eq.s32.totalorder %s23, 0
      %p137 = por %p135, %p136
      %p138 = scmp.ne.s32.totalorder %s127, %s130
      %p139 = scmp.eq.s32.totalorder %s28, 1
      %p140 = por %p138, %p139
      %p141 = scmp.ne.s32.totalorder %s130, %s131
      %p142 = scmp.eq.s32.totalorder %s28, 0
      %p143 = por %p141, %p142
      %p144 = scmp.ne.s32.totalorder %s130, %s131
      %p145 = scmp.eq.s32.totalorder %s29, 1
      %p146 = por %p144, %p145
      %p148 = scmp.ne.s32.totalorder %s131, %s147
      %p149 = scmp.eq.s32.totalorder %s29, 0
      %p150 = por %p148, %p149
      %s151 = ssub.s32 %s23, %s30
      %p152 = scmp.eq.s32.totalorder %s151, 0
      %s154 = sadd.s32 %s153, 1
      %s155 = scalar_select %p152, %s153, %s154
      %p158 = pneg %p152
      %p159 = scmp.eq.s32.totalorder %s23, 1
      %p160 = por %p158, %p159
      %p161 = scmp.ne.s32.totalorder %s153, %s156
      %p162 = scmp.eq.s32.totalorder %s23, 0
      %p163 = por %p161, %p162
      %p164 = scmp.ne.s32.totalorder %s153, %s156
      %p165 = scmp.eq.s32.totalorder %s28, 1
      %p166 = por %p164, %p165
      %p167 = scmp.ne.s32.totalorder %s156, %s157
      %p168 = scmp.eq.s32.totalorder %s28, 0
      %p169 = por %p167, %p168
      %p170 = scmp.ne.s32.totalorder %s156, %s157
      %p171 = scmp.eq.s32.totalorder %s29, 1
      %p172 = por %p170, %p171
      %p174 = scmp.ne.s32.totalorder %s157, %s173
      %p175 = scmp.eq.s32.totalorder %s29, 0
      %p176 = por %p174, %p175
      %s177 = ssub.s32 %s23, %s30
      %p178 = scmp.eq.s32.totalorder %s177, 0
      %s180 = sadd.s32 %s179, 1
      %s181 = scalar_select %p178, %s179, %s180
      %p184 = pneg %p178
      %p185 = scmp.eq.s32.totalorder %s23, 1
      %p186 = por %p184, %p185
      %p187 = scmp.ne.s32.totalorder %s179, %s182
      %p188 = scmp.eq.s32.totalorder %s23, 0
      %p189 = por %p187, %p188
      %p190 = scmp.ne.s32.totalorder %s179, %s182
      %p191 = scmp.eq.s32.totalorder %s28, 1
      %p192 = por %p190, %p191
      %p193 = scmp.ne.s32.totalorder %s182, %s183
      %p194 = scmp.eq.s32.totalorder %s28, 0
      %p195 = por %p193, %p194
      %p196 = scmp.ne.s32.totalorder %s182, %s183
      %p197 = scmp.eq.s32.totalorder %s29, 1
      %p198 = por %p196, %p197
      %p200 = scmp.ne.s32.totalorder %s183, %s199
      %p201 = scmp.eq.s32.totalorder %s29, 0
      %p202 = por %p200, %p201
      %s203 = ssub.s32 %s23, %s30
      %p204 = scmp.eq.s32.totalorder %s203, 0
      %s206 = sadd.s32 %s205, 1
      %s207 = scalar_select %p204, %s205, %s206
      %p210 = pneg %p204
      %p211 = scmp.eq.s32.totalorder %s23, 1
      %p212 = por %p210, %p211
      %p213 = scmp.ne.s32.totalorder %s205, %s208
      %p214 = scmp.eq.s32.totalorder %s23, 0
      %p215 = por %p213, %p214
      %p216 = scmp.ne.s32.totalorder %s205, %s208
      %p217 = scmp.eq.s32.totalorder %s28, 1
      %p218 = por %p216, %p217
      %p219 = scmp.ne.s32.totalorder %s208, %s209
      %p220 = scmp.eq.s32.totalorder %s28, 0
      %p221 = por %p219, %p220
      %p222 = scmp.ne.s32.totalorder %s208, %s209
      %p223 = scmp.eq.s32.totalorder %s29, 1
      %p224 = por %p222, %p223
      %p226 = scmp.ne.s32.totalorder %s209, %s225
      %p227 = scmp.eq.s32.totalorder %s29, 0
      %p228 = por %p226, %p227
      %p229 = scmp.le.s32.totalorder 1, %s23
      %p230 = scmp.lt.s32.totalorder %s23, 3
      %p231 = pnand %p229, %p230
      %p232 = pneg %p231
      // Predicated region
      $region9: #{tpu_custom_call.1} parent=5 // pred_check
        _
      $region10: #{tpu_custom_call.1} parent=5 // pred_check_branch
        %234 = sbr.rel (%p231) target = $region12
      $region11: #{tpu_custom_call.1} parent=5 // pred_region
        %s235 = ssub.s32 %s23, 1
        // Predicated region
        $region13: #{tpu_custom_call.1} parent=11 // pred_check
          %p236 = pneg %p44
        $region14: #{tpu_custom_call.1} parent=11 // pred_check_branch
          %238 = sbr.rel (%p236) target = $region16
        $region15: #{tpu_custom_call.1} parent=11 // pred_region
          _
        $region16: #{tpu_custom_call.1} parent=11 // pred_fallthru
          _
        // Predicated region
        $region17: #{tpu_custom_call.1} parent=11 // pred_check
          %p239 = pneg %p65
        $region18: #{tpu_custom_call.1} parent=11 // pred_check_branch
          %241 = sbr.rel (%p239) target = $region20
        $region19: #{tpu_custom_call.1} parent=11 // pred_region
          %243 = vsyncadd [#allocation6], 0
          %s244 = sshll.u32 %s1, 4
          %s245 = int_to_ptr.hbm [resolvable:$true] %s244
          %s246 = sshll.u32 [#allocation5], 4
          %s247 = int_to_ptr.vmem [resolvable:$true] %s246
          %252 = dma.hbm_to_vmem [thread:$0]  %s245, 512, %s247, [#allocation6], 128, 128, 8
        $region20: #{tpu_custom_call.1} parent=11 // pred_fallthru
          _
      $region12: #{tpu_custom_call.1} parent=5 // pred_fallthru
        _
      %p253 = scmp.lt.s32.totalorder %s23, 2
      // Predicated region
      $region21: #{tpu_custom_call.1} parent=5 // pred_check
        %p254 = pneg %p253
      $region22: #{tpu_custom_call.1} parent=5 // pred_check_branch
        %256 = sbr.rel (%p254) target = $region24
      $region23: #{tpu_custom_call.1} parent=5 // pred_region
        // Predicated region
        $region25: #{tpu_custom_call.1} parent=23 // pred_check
          %p257 = pneg %p85
        $region26: #{tpu_custom_call.1} parent=23 // pred_check_branch
          %259 = sbr.rel (%p257) target = $region28
        $region27: #{tpu_custom_call.1} parent=23 // pred_region
          %s260 = sand.u32 %s23, 1
          %s261 = scalar_lea.sflag [#allocation9], %s260
          %s262 = sand.u32 %s75, 1
          %s263 = smul.addr %s262, 8
          %s264 = scalar_lea.vmem [#allocation8], %s263
          %266 = vsyncadd %s261, 0
          %s267 = smul.addr %s23, 8
          %s268 = scalar_lea.hbm %s2, %s267
          %s270 = sshll.u32 %s268, 4
          %s271 = int_to_ptr.hbm [resolvable:$true] %s270
          %s272 = sshll.u32 %s264, 4
          %s273 = int_to_ptr.vmem [resolvable:$true] %s272
          %275 = dma.hbm_to_vmem [thread:$0]  %s271, 128, %s273, %s261
        $region28: #{tpu_custom_call.1} parent=23 // pred_fallthru
          _
        // Predicated region
        $region29: #{tpu_custom_call.1} parent=23 // pred_check
          %p276 = pneg %p111
        $region30: #{tpu_custom_call.1} parent=23 // pred_check_branch
          %278 = sbr.rel (%p276) target = $region32
        $region31: #{tpu_custom_call.1} parent=23 // pred_region
          %s279 = sand.u32 %s23, 1
          %s280 = scalar_lea.sflag [#allocation9], %s279
          %s281 = sand.u32 %s101, 1
          %s282 = smul.addr %s281, 8
          %s283 = scalar_lea.vmem [#allocation10], %s282
          %285 = vsyncadd %s280, 0
          %s286 = smul.addr %s23, 8
          %s287 = scalar_lea.hbm %s3, %s286
          %s289 = sshll.u32 %s287, 4
          %s290 = int_to_ptr.hbm [resolvable:$true] %s289
          %s291 = sshll.u32 %s283, 4
          %s292 = int_to_ptr.vmem [resolvable:$true] %s291
          %294 = dma.hbm_to_vmem [thread:$0]  %s290, 128, %s292, %s280
        $region32: #{tpu_custom_call.1} parent=23 // pred_fallthru
          _
        // Predicated region
        $region33: #{tpu_custom_call.1} parent=23 // pred_check
          %p295 = pneg %p137
        $region34: #{tpu_custom_call.1} parent=23 // pred_check_branch
          %297 = sbr.rel (%p295) target = $region36
        $region35: #{tpu_custom_call.1} parent=23 // pred_region
          %s298 = sand.u32 %s23, 1
          %s299 = scalar_lea.sflag [#allocation12], %s298
          %s300 = sand.u32 %s127, 1
          %s301 = smul.addr %s300, 32
          %s302 = scalar_lea.vmem [#allocation11], %s301
          %304 = vsyncadd %s299, 0
          %s305 = smul.addr %s23, 4
          %s306 = smul.addr %s305, 8
          %s307 = scalar_lea.hbm %s4, %s306
          %s308 = sshll.u32 %s307, 4
          %s309 = int_to_ptr.hbm [resolvable:$true] %s308
          %s310 = sshll.u32 %s302, 4
          %s311 = int_to_ptr.vmem [resolvable:$true] %s310
          %316 = dma.hbm_to_vmem [thread:$0]  %s309, 512, %s311, %s299, 128, 128, 8
        $region36: #{tpu_custom_call.1} parent=23 // pred_fallthru
          _
        // Predicated region
        $region37: #{tpu_custom_call.1} parent=23 // pred_check
          %p317 = pneg %p163
        $region38: #{tpu_custom_call.1} parent=23 // pred_check_branch
          %319 = sbr.rel (%p317) target = $region40
        $region39: #{tpu_custom_call.1} parent=23 // pred_region
          %p320 = scmp.lt.s32.totalorder %s23, 1
          %s321 = scalar_select %p320, %s23, 1
          %s322 = scalar_lea.vmem %s5, %s321
        $region40: #{tpu_custom_call.1} parent=23 // pred_fallthru
          _
        // Predicated region
        $region41: #{tpu_custom_call.1} parent=23 // pred_check
          %p323 = pneg %p189
        $region42: #{tpu_custom_call.1} parent=23 // pred_check_branch
          %325 = sbr.rel (%p323) target = $region44
        $region43: #{tpu_custom_call.1} parent=23 // pred_region
          %s326 = sand.u32 %s23, 1
          %s327 = scalar_lea.sflag [#allocation12], %s326
          %s328 = sand.u32 %s179, 1
          %s329 = smul.addr %s328, 16
          %s330 = scalar_lea.vmem [#allocation13], %s329
          %332 = vsyncadd %s327, 0
          %s333 = smul.addr %s23, 2
          %s334 = smul.addr %s333, 8
          %s335 = scalar_lea.hbm %s6, %s334
          %s336 = sshll.u32 %s335, 4
          %s337 = int_to_ptr.hbm [resolvable:$true] %s336
          %s338 = sshll.u32 %s330, 4
          %s339 = int_to_ptr.vmem [resolvable:$true] %s338
          %344 = dma.hbm_to_vmem [thread:$0]  %s337, 256, %s339, %s327, 128, 128, 8
        $region44: #{tpu_custom_call.1} parent=23 // pred_fallthru
          _
      $region24: #{tpu_custom_call.1} parent=5 // pred_fallthru
        _
      %p345 = scmp.le.s32.totalorder 1, %s23
      %p346 = scmp.lt.s32.totalorder %s23, 3
      %p347 = pnand %p345, %p346
      %p348 = pneg %p347
      // Predicated region
      $region45: #{tpu_custom_call.1} parent=5 // pred_check
        _
      $region46: #{tpu_custom_call.1} parent=5 // pred_check_branch
        %350 = sbr.rel (%p347) target = $region48
      $region47: #{tpu_custom_call.1} parent=5 // pred_region
        %s351 = ssub.s32 %s23, 1
        // Predicated region
        $region49: #{tpu_custom_call.1} parent=47 // pred_check
          %p352 = pneg %p65
        $region50: #{tpu_custom_call.1} parent=47 // pred_check_branch
          %354 = sbr.rel (%p352) target = $region52
        $region51: #{tpu_custom_call.1} parent=47 // pred_region
          %356 = dma.done [#allocation6], 512
        $region52: #{tpu_custom_call.1} parent=47 // pred_fallthru
          _
        %s357 = sand.u32 %s28, 1
        %s358 = scalar_lea.sflag [#allocation9], %s357
        %s359 = sand.u32 %s78, 1
        %s360 = smul.addr %s359, 8
        %s361 = scalar_lea.vmem [#allocation8], %s360
        // Predicated region
        $region53: #{tpu_custom_call.1} parent=47 // pred_check
          %p362 = pneg %p91
        $region54: #{tpu_custom_call.1} parent=47 // pred_check_branch
          %364 = sbr.rel (%p362) target = $region56
        $region55: #{tpu_custom_call.1} parent=47 // pred_region
          %366 = dma.done %s358, 128
        $region56: #{tpu_custom_call.1} parent=47 // pred_fallthru
          _
        %s367 = sand.u32 %s28, 1
        %s368 = scalar_lea.sflag [#allocation9], %s367
        %s369 = sand.u32 %s104, 1
        %s370 = smul.addr %s369, 8
        %s371 = scalar_lea.vmem [#allocation10], %s370
        // Predicated region
        $region57: #{tpu_custom_call.1} parent=47 // pred_check
          %p372 = pneg %p117
        $region58: #{tpu_custom_call.1} parent=47 // pred_check_branch
          %374 = sbr.rel (%p372) target = $region60
        $region59: #{tpu_custom_call.1} parent=47 // pred_region
          %376 = dma.done %s368, 128
        $region60: #{tpu_custom_call.1} parent=47 // pred_fallthru
          _
        %s377 = sand.u32 %s28, 1
        %s378 = scalar_lea.sflag [#allocation12], %s377
        %s379 = sand.u32 %s130, 1
        %s380 = smul.addr %s379, 32
        %s381 = scalar_lea.vmem [#allocation11], %s380
        // Predicated region
        $region61: #{tpu_custom_call.1} parent=47 // pred_check
          %p382 = pneg %p143
        $region62: #{tpu_custom_call.1} parent=47 // pred_check_branch
          %384 = sbr.rel (%p382) target = $region64
        $region63: #{tpu_custom_call.1} parent=47 // pred_region
          %386 = dma.done %s378, 512
        $region64: #{tpu_custom_call.1} parent=47 // pred_fallthru
          _
        %s387 = sand.u32 %s28, 1
        %s388 = scalar_lea.sflag [#allocation12], %s387
        %s389 = sand.u32 %s182, 1
        %s390 = smul.addr %s389, 16
        %s391 = scalar_lea.vmem [#allocation13], %s390
        // Predicated region
        $region65: #{tpu_custom_call.1} parent=47 // pred_check
          %p392 = pneg %p195
        $region66: #{tpu_custom_call.1} parent=47 // pred_check_branch
          %394 = sbr.rel (%p392) target = $region68
        $region67: #{tpu_custom_call.1} parent=47 // pred_region
          %396 = dma.done %s388, 256
        $region68: #{tpu_custom_call.1} parent=47 // pred_fallthru
          _
        %p397 = pneg %p44
        %p398 = pneg %p41
        %p399 = pneg %p65
        %p400 = pneg %p62
        %s401 = sand.u32 %s28, 1
        %s402 = scalar_lea.sflag [#allocation9], %s401
        %s403 = sand.u32 %s78, 1
        %s404 = smul.addr %s403, 8
        %s405 = scalar_lea.vmem [#allocation8], %s404
        %p406 = pneg %p91
        %p407 = pneg %p88
        %s408 = sand.u32 %s28, 1
        %s409 = scalar_lea.sflag [#allocation9], %s408
        %s410 = sand.u32 %s104, 1
        %s411 = smul.addr %s410, 8
        %s412 = scalar_lea.vmem [#allocation10], %s411
        %p413 = pneg %p117
        %p414 = pneg %p114
        %s415 = sand.u32 %s28, 1
        %s416 = scalar_lea.sflag [#allocation12], %s415
        %s417 = sand.u32 %s130, 1
        %s418 = smul.addr %s417, 32
        %s419 = scalar_lea.vmem [#allocation11], %s418
        %p420 = pneg %p143
        %p421 = pneg %p140
        %p422 = scmp.lt.s32.totalorder %s28, 1
        %s423 = scalar_select %p422, %s28, 1
        %s424 = scalar_lea.vmem %s5, %s423
        %p425 = pneg %p169
        %p426 = pneg %p166
        %s427 = sand.u32 %s28, 1
        %s428 = scalar_lea.sflag [#allocation12], %s427
        %s429 = sand.u32 %s182, 1
        %s430 = smul.addr %s429, 16
        %s431 = scalar_lea.vmem [#allocation13], %s430
        %p432 = pneg %p195
        %p433 = pneg %p192
        %p434 = pneg %p221
        %p435 = pneg %p218
        %s436 = sand.u32 %s208, 1
        %s437 = scalar_lea.sflag [#allocation7], %s436
        %s438 = sand.u32 %s208, 1
        %s439 = smul.addr %s438, 32
        %s440 = scalar_lea.vmem [#allocation14], %s439
        %p441 = scmp.lt.s32.totalorder %s28, 1
        %s442 = scalar_select %p441, %s28, 1
        %s443 = scalar_lea.vmem %s5, %s442
        %v444 = vld [vmem:[#allocation5] sm:$0xff]
        %v445 = vld [vmem:[#allocation5 + $0x8] sm:$0xff]
        %v446 = vld [vmem:[#allocation5 + $0x10] sm:$0xff]
        %v447 = vld [vmem:[#allocation5 + $0x18] sm:$0xff]
        %v448 = vld [vmem:[%s381] sm:$0xff]
        %v449 = vld [vmem:[%s381 + $0x8] sm:$0xff]
        %v450 = vld [vmem:[%s381 + $0x10] sm:$0xff]
        %v451 = vld [vmem:[%s381 + $0x18] sm:$0xff]
        %v452 = vld [vmem:[%s443] sm:$0x1]
        %v454 = vperm.slane %v452, 0
        %vm456 = vcmask 261120
        %v458 = vsel %vm456, %v444, 0
        %v461 = vsel %vm456, %v445, 0
        %v464 = vsel %vm456, %v446, 0
        %v467 = vsel %vm456, %v447, 0
        %469 = vmatpush.msra.mxu0 0.0
        %470 = vmatpush.msra.mxu0 0.0
        %471 = vmatpush.msra.mxu0 0.0
        %472 = vmatpush.msra.mxu0 0.0
        %473 = vmatpush.msra.mxu0 0.0
        %474 = vmatpush.msra.mxu0 0.0
        %475 = vmatpush.msra.mxu0 0.0
        %476 = vmatpush.msra.mxu0 0.0
        %477 = vmatpush.msra.mxu0 0.0
        %478 = vmatpush.msra.mxu0 0.0
        %479 = vmatpush.msra.mxu0 0.0
        %480 = vmatpush.msra.mxu0 0.0
        %481 = vmatpush.msra.mxu0 %v451
        %482 = vmatpush.msra.mxu0 %v450
        %483 = vmatpush.msra.mxu0 %v449
        %484 = vmatpush.msra.mxu0 %v448
        %485 = vmatmul.f32.gmra.mxu0 %v458
        %v486 = vpop.f32.mrf.mxu0
        %v487 = vadd.f32 %v454, %v486
        %488 = vmatmul.f32.gmra.mxu0 %v461
        %v489 = vpop.f32.mrf.mxu0
        %v490 = vadd.f32 %v454, %v489
        %491 = vmatmul.f32.gmra.mxu0 %v464
        %v492 = vpop.f32.mrf.mxu0
        %v493 = vadd.f32 %v454, %v492
        %494 = vmatmul.f32.gmra.mxu0 %v467
        %v495 = vpop.f32.mrf.mxu0
        %v496 = vadd.f32 %v454, %v495
        %497 = vdwg.mxu0
        %vm498 = vcmask 523264
        %499 = vst.msk [vmem:[#allocation2] sm:$0xff] %vm498, %v487
        %500 = vst.msk [vmem:[#allocation2 + $0x8] sm:$0xff] %vm498, %v490
        %501 = vst.msk [vmem:[#allocation2 + $0x10] sm:$0xff] %vm498, %v493
        %502 = vst.msk [vmem:[#allocation2 + $0x18] sm:$0xff] %vm498, %v496
        %v503 = vld [vmem:[%s361] sm:$0xff]
        %vm504 = vcmask 130048
        %505 = vst.msk [vmem:[#allocation3] sm:$0xff] %vm504, %v503
        %v506 = vld [vmem:[%s371] sm:$0xff]
        %507 = vst.msk [vmem:[#allocation4] sm:$0xff] %vm504, %v506
        %v508 = vld [vmem:[%s0] sm:$0xff]
        %v509 = vld [vmem:[%s391] sm:$0xff]
        %v510 = vld [vmem:[%s391 + $0x8] sm:$0xff]
        loop: start=0, step=1, limit=4
        $region69: #{tpu_custom_call.1} parent=47 // loop_pre_header
          _
        $region70: #{tpu_custom_call.1} parent=47 // loop_header
          %s512 = sphi 0, %s516
          %p513 = scmp.ge.s32.totalorder %s512, 4
        $region71: #{tpu_custom_call.1} parent=47 // loop_header_branch
          %515 = sbr.rel (%p513) target = $region75
        $region72: #{tpu_custom_call.1} parent=47 // loop_body
          %s517 = smul.u32 %s28, 3
          %s518 = smul.u32 %s28, 2
          %s519 = ssub.s32 1, %s518
          %s520 = smul.u32 %s519, %s512
          %s521 = sadd.s32 %s517, %s520
          %v522 = vstv %s521
          %vm523 = vcmp.lt.s32.totalorder %v522, %v508
          %v524 = vsel %vm523, 1, 0
          %v525 = vcvt.s32.f32 %v524
          %s526 = smul.u32 %s521, 8
          %s527 = scalar_lea.vmem [#allocation2], %s526
          %v528 = vld [vmem:[%s527] sm:$0xff]
          %v529 = vld [vmem:[#allocation3] sm:$0xff]
          %v531 = vsel %vm504, %v529, 0
          %533 = vmatpush.msra.mxu0 0.0
          %534 = vmatpush.msra.mxu0 0.0
          %535 = vmatpush.msra.mxu0 0.0
          %536 = vmatpush.msra.mxu0 0.0
          %537 = vmatpush.msra.mxu0 0.0
          %538 = vmatpush.msra.mxu0 0.0
          %539 = vmatpush.msra.mxu0 0.0
          %540 = vmatpush.msra.mxu0 0.0
          %541 = vmatpush.msra.mxu0 0.0
          %542 = vmatpush.msra.mxu0 0.0
          %543 = vmatpush.msra.mxu0 0.0
          %544 = vmatpush.msra.mxu0 0.0
          %545 = vmatpush.msra.mxu0 0.0
          %546 = vmatpush.msra.mxu0 0.0
          %547 = vmatpush.msra.mxu0 %v510
          %548 = vmatpush.msra.mxu0 %v509
          %549 = vmatmul.f32.gmra.mxu0 %v531
          %v550 = vpop.f32.mrf.mxu0
          %v551 = vadd.f32 0.0, %v550
          %552 = vdwg.mxu0
          %v553 = vadd.f32 %v528, %v551
          %v554 = vxor.u32 %v553, 2147483648
          %v555 = vmul.f32 %v554, 1.442695
          %v556 = vpow.pop %v555
          %v557 = vadd.f32 %v556, 1.0
          %v558 = vrcp.pop %v557
          %v559 = vmul.f32 %v557, %v558
          %v560 = vsub.f32 1.0, %v559
          %v561 = vmul.f32 %v558, %v560
          %v562 = vadd.f32 %v558, %v561
          %vm563 = vweird.f32 %v557
          %vm564 = vweird.f32 %v558
          %vm565 = vmor %vm563, %vm564
          %v566 = vsel %vm565, %v558, %v562
          %v567 = vand.u32 2147483647, %v557
          %vm568 = vcmp.eq.f32.partialorder %v567, 8.507059e+37
          %v569 = vand.u32 %v557, 2147483648
          %v570 = vor.u32 1.1754944e-38, %v569
          %v571 = vsel %vm568, %v570, %v566
          %v572 = vmul.f32 1.0, %v571
          %v573 = vtanh.pop %v553
          %v574 = vld [vmem:[#allocation4] sm:$0xff]
          %576 = vrot.lane.b32.xlu0 %v574, 16
          %v577 = vpop.permute.xlu0 %576
          %v579 = vmul.f32 %v572, %v577
          %581 = vrot.lane.b32.xlu0 %v573, 96
          %v582 = vpop.permute.xlu0 %581
          %v584 = vmul.f32 %v572, %v582
          %586 = vrot.lane.b32.xlu0 %v584, 16
          %v587 = vpop.permute.xlu0 %586
          %v589 = vadd.f32 %v579, %v587
          %v590 = vtanh.pop %v589
          %592 = vrot.lane.b32.xlu0 %v590, 32
          %v593 = vpop.permute.xlu0 %592
          %v595 = vmul.f32 %v572, %v593
          %597 = vset.pattern.permute.xlu0 0
          %598 = vperm.xlu0 %597, %v525
          %v599 = vpop.permute.xlu0 %598
          %v601 = vmul.f32 %v599, %v595
          %v602 = vsub.f32 1.0, %v525
          %604 = vset.pattern.permute.xlu0 0
          %605 = vperm.xlu0 %604, %v602
          %v606 = vpop.permute.xlu0 %605
          %v608 = vmul.f32 %v606, %v529
          %610 = vrot.lane.b32.xlu0 %v608, 48
          %v611 = vpop.permute.xlu0 %610
          %v613 = vadd.f32 %v601, %v611
          %615 = vrot.lane.b32.xlu0 %v613, 80
          %v616 = vpop.permute.xlu0 %615
          %618 = vst.msk [vmem:[#allocation3] sm:$0xff] %vm504, %v616
          %v619 = vmul.f32 %v599, %v589
          %v620 = vld [vmem:[#allocation4] sm:$0xff]
          %v621 = vmul.f32 %v606, %v620
          %623 = vrot.lane.b32.xlu0 %v621, 16
          %v624 = vpop.permute.xlu0 %623
          %v626 = vadd.f32 %v619, %v624
          %628 = vrot.lane.b32.xlu0 %v626, 112
          %v629 = vpop.permute.xlu0 %628
          %631 = vst.msk [vmem:[#allocation4] sm:$0xff] %vm504, %v629
          %633 = vrot.lane.b32.xlu0 %v601, 80
          %v634 = vpop.permute.xlu0 %633
          %s636 = scalar_lea.vmem %s440, %s526 [#allocation14]
          %637 = vst.msk [vmem:[%s636] sm:$0xff] %vm504, %v634
        $region73: #{tpu_custom_call.1} parent=47 // loop_footer
          %s516 = sadd.s32 1, %s512
        $region74: #{tpu_custom_call.1} parent=47 // loop_footer_branch
          %511 = sbr.rel target = $region70
        $region75: #{tpu_custom_call.1} parent=47 // loop_exit
          _
        %s638 = sand.u32 %s208, 1
        %s639 = scalar_lea.sflag [#allocation7], %s638
        %s640 = sand.u32 %s208, 1
        %s641 = smul.addr %s640, 32
        %s642 = scalar_lea.vmem [#allocation14], %s641
        // Predicated region
        $region76: #{tpu_custom_call.1} parent=47 // pred_check
          %p643 = pneg %p218
        $region77: #{tpu_custom_call.1} parent=47 // pred_check_branch
          %645 = sbr.rel (%p643) target = $region79
        $region78: #{tpu_custom_call.1} parent=47 // pred_region
          %647 = vsyncadd %s639, 0
          %s648 = smul.addr %s28, 4
          %s649 = smul.addr %s648, 8
          %s650 = scalar_lea.hbm %s7, %s649
          %s651 = sshll.u32 %s642, 4
          %s652 = int_to_ptr.vmem [resolvable:$true] %s651
          %s653 = sshll.u32 %s650, 4
          %s654 = int_to_ptr.hbm [resolvable:$true] %s653
          %659 = dma.vmem_to_hbm [thread:$0]  %s652, 512, %s654, %s639, 128, 128, 8
        $region79: #{tpu_custom_call.1} parent=47 // pred_fallthru
          _
      $region48: #{tpu_custom_call.1} parent=5 // pred_fallthru
        _
      %p660 = scmp.le.s32.totalorder 2, %s23
      // Predicated region
      $region80: #{tpu_custom_call.1} parent=5 // pred_check
        %p661 = pneg %p660
      $region81: #{tpu_custom_call.1} parent=5 // pred_check_branch
        %663 = sbr.rel (%p661) target = $region83
      $region82: #{tpu_custom_call.1} parent=5 // pred_region
        %s664 = ssub.s32 %s23, 2
        // Predicated region
        $region84: #{tpu_custom_call.1} parent=82 // pred_check
          %p665 = pneg %p224
        $region85: #{tpu_custom_call.1} parent=82 // pred_check_branch
          %667 = sbr.rel (%p665) target = $region87
        $region86: #{tpu_custom_call.1} parent=82 // pred_region
          %s668 = sand.u32 %s209, 1
          %s669 = scalar_lea.sflag [#allocation7], %s668
          %s670 = sand.u32 %s209, 1
          %s671 = smul.addr %s670, 32
          %s672 = scalar_lea.vmem [#allocation14], %s671
          %674 = dma.done %s669, 512
        $region87: #{tpu_custom_call.1} parent=82 // pred_fallthru
          _
      $region83: #{tpu_custom_call.1} parent=5 // pred_fallthru
        _
    $region6: #{tpu_custom_call.1} parent=1 // loop_footer
      %s27 = sadd.s32 1, %s23
    $region7: #{tpu_custom_call.1} parent=1 // loop_footer_branch
      %22 = sbr.rel target = $region3
    $region8: #{tpu_custom_call.1} parent=1 // loop_exit
      _
    %675 = vsyncpa [#allocation6], 1
    %s676 = scalar_lea.sflag [#allocation6], 1
    %677 = vsyncpa %s676, 1
    %678 = vsyncpa [#allocation9], 1
    %s679 = scalar_lea.sflag [#allocation9], 1
    %680 = vsyncpa %s679, 1
    %681 = vsyncpa [#allocation12], 1
    %s682 = scalar_lea.sflag [#allocation12], 1
    %683 = vsyncpa %s682, 1
    %684 = vsyncpa [#allocation7], 1
    %s685 = scalar_lea.sflag [#allocation7], 1
    %686 = vsyncpa %s685, 1

</llo_original>
